<compile_context>
chip_gen: v5e
topology: v5e:2x2
jax: 0.10.0
libtpu: 0.0.40
codegen_flags: <defaults>
</compile_context>

<pallas_src>
import functools

import jax
import jax.numpy as jnp
from jax.experimental import pallas as pl
from jax.experimental.pallas import tpu as pltpu

NEG_INF = -1e30   # additive mask for non-edges (finite, bf16-representable)
NEG_SLOPE = 0.2   # GATConv default LeakyReLU slope


def _cdiv(a, b):
    return -(-a // b)


def spatial_encoder_kernel(x_ref, bias_ref, pool_ref,
                           w1_ref, ad1_ref, as1t_ref, b1_ref,
                           w2_ref, ad2_ref, as2_ref, b2_ref,
                           out_ref, *, heads, hidden, compute_dtype):
    cd = compute_dtype
    f32 = jnp.float32

    def mxu(a, b):                      # a @ b      (MXU, f32 accumulation)
        return jnp.dot(a, b, preferred_element_type=f32)

    def mxu_bt(a, b):                   # a @ b.T    (MXU, f32 accumulation)
        return jax.lax.dot_general(a, b, (((1,), (1,)), ((), ())),
                                   preferred_element_type=f32)

    def attn_unnorm(raw, bias):
        """LeakyReLU -> +edge mask -> exp; normalization deferred (returns e, 1/sum)."""
        s = jnp.where(raw > 0, raw, NEG_SLOPE * raw) + bias
        m = jnp.max(s, axis=-1, keepdims=True)
        e = jnp.exp(s - m)                       # masked entries underflow to exactly 0
        den = jnp.sum(e, axis=-1, keepdims=True)
        r = pl.reciprocal(den, approx=True)      # EUP slot -> essentially free
        r = r * (2.0 - den * r)                  # one Newton step -> full f32 accuracy
        return e, r

    x = x_ref[0]                          # [GM, C_in]   (compute dtype)
    bias = bias_ref[0].astype(f32)        # [GM, GM]     bf16 -> f32 once, reused
    pool = pool_ref[0]                    # [G, GM]      (compute dtype)

    # ---------------- GAT layer 1 (heads, concat=True) ----------------
    h1 = mxu(x, w1_ref[...])              # [GM, H*hid]  f32
    h1c = h1.astype(cd)                   # cast ONCE; reused by every head's matmul
    # all heads' coefficients from two lane-dense matmuls (block-diag fold in glue)
    dst = mxu(h1c, ad1_ref[...])          # [GM, H]   per-target coefficients
    src = mxu_bt(as1t_ref[...], h1c)      # [H, GM]   per-source coefficients (row form)

    parts = []
    for h in range(heads):                # static unroll
        lo = h * hidden
        e, r = attn_unnorm(dst[:, h:h + 1] + src[h:h + 1, :], bias)
        # deferred normalization: scale the [GM, hid] result, not the [GM, GM] probs
        parts.append(mxu(e.astype(cd), h1c[:, lo:lo + hidden]) * r)
    x1 = jnp.maximum(jnp.concatenate(parts, axis=-1) + b1_ref[...], 0.0)
    x1c = x1.astype(cd)                   # cast ONCE

    # ---------------- GAT layer 2 (1 head, concat=True) ----------------
    h2 = mxu(x1c, w2_ref[...])            # [GM, out_p]  f32
    h2c = h2.astype(cd)
    dst2 = jnp.sum(h2 * ad2_ref[...], axis=-1, keepdims=True)   # [GM, 1] lane reduce
    src2 = mxu_bt(as2_ref[...], h2c)                            # [1, GM]
    e2, r2 = attn_unnorm(dst2 + src2, bias)
    x2 = mxu(e2.astype(cd), h2c) * r2 + b2_ref[...]             # [GM, out_p]  f32

    # -------- global_mean_pool for all G packed graphs: one lane-dense matmul ----
    out_ref[0] = mxu(pool, x2.astype(cd)).astype(out_ref.dtype)  # [G, out_p]


def spatial_encoder(x, edge_index, batch, params, *, heads, hidden, out_channels,
                    num_graphs, max_nodes, compute_dtype=jnp.bfloat16):
    """x:(N,C_in) f32, edge_index:(2,E) int32 (PyG source->target), batch:(N,) int32."""
    n, in_c = x.shape
    f32 = jnp.float32
    cd = compute_dtype
    it = jnp.dtype(cd).itemsize

    # sublane-aligned nodes per graph (bf16 packs 16 rows per vreg, f32 packs 8)
    sub = 16 if cd == jnp.bfloat16 else 8
    mp = _cdiv(max_nodes, sub) * sub
    out_p = _cdiv(out_channels, 128) * 128            # lane-dense output block
    hhid = heads * hidden

    # ---- graph packing: G graphs per grid step, even step count when possible ----
    g0 = max(1, min(num_graphs, 256 // mp))
    steps = _cdiv(num_graphs, g0)
    if steps == 1 and num_graphs >= 2:
        steps = 2                                      # keep both v7x TCs busy
    elif steps > 1 and steps % 2 == 1:
        steps += 1                                     # even grid for v7x balance
    g_per = _cdiv(num_graphs, steps)
    gm = g_per * mp                                    # packed rows per grid step

    # ---- glue: scatter nodes into the packed per-step layout [steps, GM, C] ----
    # TODO(synk): assumes `batch` is sorted by graph (PyG Batch convention).
    counts = jnp.zeros((num_graphs,), jnp.int32).at[batch].add(1)
    offsets = jnp.concatenate([jnp.zeros((1,), jnp.int32), jnp.cumsum(counts)[:-1]])
    pos = jnp.arange(n, dtype=jnp.int32) - offsets[batch]
    step_id = batch // g_per
    slot_id = batch % g_per
    row_id = slot_id * mp + pos

    xp = jnp.zeros((steps, gm, in_c), f32).at[step_id, row_id].set(x).astype(cd)

    # packed adjacency adj[step, target_row, source_row] (+ self loops) -> additive
    # bias shipped in bf16 (only O(GM^2) per-step input -> halves DMA + VMEM buffers)
    esrc, edst = edge_index[0], edge_index[1]
    adj = jnp.zeros((steps, gm, gm), f32)
    adj = adj.at[step_id[esrc], row_id[edst], row_id[esrc]].set(1.0)
    adj = jnp.maximum(adj, jnp.eye(gm, dtype=f32)[None])
    bias = jnp.where(adj > 0, 0.0, NEG_INF).astype(jnp.bfloat16)

    # mean-pool matrix [steps, G, GM]: 1/|graph| on that graph's valid rows
    cnt_f = jnp.maximum(counts.astype(f32), 1.0)
    pool = jnp.zeros((steps, g_per, gm), f32).at[
        step_id, slot_id, row_id].set(1.0 / cnt_f[batch]).astype(cd)

    # fold per-head attention vectors into block-diagonal matrices so one matmul
    # yields all heads' coefficients (dst as columns, src directly in row form)
    eye_h = jnp.repeat(jnp.eye(heads, dtype=f32), hidden, axis=0)       # [H*hid, H]
    ad1 = (eye_h * params["att_dst1"].reshape(-1, 1)).astype(cd)        # [H*hid, H]
    as1t = (eye_h * params["att_src1"].reshape(-1, 1)).T.astype(cd)     # [H, H*hid]

    # pad layer-2 params to the lane-dense output width (zeros don't change math)
    pad = out_p - out_channels
    w2 = jnp.pad(params["w2"], ((0, 0), (0, pad))).astype(cd)
    b2 = jnp.pad(params["b2"], ((0, 0), (0, pad)))
    ad2 = jnp.pad(params["att_dst2"], ((0, 0), (0, pad)))               # f32 (VPU)
    as2 = jnp.pad(params["att_src2"], ((0, 0), (0, pad))).astype(cd)    # MXU operand

    args = (xp, bias, pool,
            params["w1"].astype(cd), ad1, as1t, params["b1"],
            w2, ad2, as2, b2)

    def per_step(a):                    # one packed block per grid step
        return pl.BlockSpec((1,) + a.shape[1:], lambda b: (b, 0, 0))

    def resident(a):                    # whole array VMEM-resident across the grid
        return pl.BlockSpec(a.shape, lambda b: (0, 0))

    # VMEM budget derived from actual tile sizes (v7x has only 64 MiB per TC)
    per_step_io = gm * in_c * it + gm * gm * 2 + g_per * gm * it + g_per * out_p * 4
    residents = ((in_c * hhid + hhid * heads + heads * hhid + hhid * out_p
                  + out_p) * it + (hhid + 3 * out_p) * 4)
    scratch = (6 * gm * gm + 8 * gm * hhid + 6 * gm * out_p) * 4
    vmem_limit = int(min(64 * 2**20,
                         max(16 * 2**20,
                             2 * per_step_io + 2 * residents + scratch + (4 << 20))))

    kernel = functools.partial(spatial_encoder_kernel, heads=heads, hidden=hidden,
                               compute_dtype=cd)
    out = pl.pallas_call(
        kernel,
        out_shape=jax.ShapeDtypeStruct((steps, g_per, out_p), f32),
        grid=(steps,),
        in_specs=[per_step(args[0]), per_step(args[1]), per_step(args[2])] +
                 [resident(a) for a in args[3:]],
        out_specs=pl.BlockSpec((1, g_per, out_p), lambda b: (b, 0, 0)),
        compiler_params=pltpu.CompilerParams(
            dimension_semantics=("parallel",),        # v7x: shard steps across 2 TCs
            vmem_limit_bytes=vmem_limit),
    )(*args)
    return out.reshape(steps * g_per, out_p)[:num_graphs, :out_channels]


# ---------------------------- pure-JAX reference ----------------------------
def _ref_head(h, att_src, att_dst, adj):
    a_dst = jnp.sum(h * att_dst, axis=-1, keepdims=True)
    a_src = jnp.sum(h * att_src, axis=-1)[None, :]
    s = a_dst + a_src
    s = jnp.where(s > 0, s, NEG_SLOPE * s)
    s = jnp.where(adj > 0, s, NEG_INF)
    p = jax.nn.softmax(s, axis=-1)
    return p @ h


def spatial_encoder_ref(x, edge_index, batch, params, *, heads, hidden, num_graphs):
    n = x.shape[0]
    adj = jnp.zeros((n, n)).at[edge_index[1], edge_index[0]].set(1.0)
    adj = jnp.maximum(adj, jnp.eye(n))
    h1 = x @ params["w1"]
    x1 = jnp.concatenate(
        [_ref_head(h1[:, h * hidden:(h + 1) * hidden],
                   params["att_src1"][h:h + 1], params["att_dst1"][h:h + 1], adj)
         for h in range(heads)], axis=-1) + params["b1"]
    x1 = jax.nn.relu(x1)
    h2 = x1 @ params["w2"]
    x2 = _ref_head(h2, params["att_src2"], params["att_dst2"], adj) + params["b2"]
    one_hot = (batch[None, :] == jnp.arange(num_graphs)[:, None]).astype(jnp.float32)
    return (one_hot @ x2) / jnp.clip(one_hot.sum(1, keepdims=True), 1.0)


# --------------------------------- main --------------------------------------
if __name__ == "__main__":
    N = 16            # num_nodes
    IN_C = 32         # in_channels
    HID = 16          # hidden_channels (per head)
    HEADS = 4
    OUT_C = 8         # out_channels
    B = 2             # num graphs
    NODES_PER_GRAPH = N // B

    key = jax.random.PRNGKey(0)
    ks = jax.random.split(key, 10)

    def glorot(k, shape):
        fan_in, fan_out = shape[0], shape[-1]
        lim = (6.0 / (fan_in + fan_out)) ** 0.5
        return jax.random.uniform(k, shape, jnp.float32, -lim, lim)

    params = {
        "w1": glorot(ks[0], (IN_C, HEADS * HID)),
        "att_src1": glorot(ks[1], (HEADS, HID)),
        "att_dst1": glorot(ks[2], (HEADS, HID)),
        "b1": jnp.zeros((1, HEADS * HID), jnp.float32),
        "w2": glorot(ks[3], (HEADS * HID, OUT_C)),
        "att_src2": glorot(ks[4], (1, OUT_C)),
        "att_dst2": glorot(ks[5], (1, OUT_C)),
        "b2": jnp.zeros((1, OUT_C), jnp.float32),
    }

    x = jax.random.normal(ks[6], (N, IN_C), jnp.float32)

    # Deterministic edges: a directed ring inside each graph.
    src, dst = [], []
    for gph in range(B):
        base = gph * NODES_PER_GRAPH
        for i in range(NODES_PER_GRAPH):
            src.append(base + i)
            dst.append(base + (i + 1) % NODES_PER_GRAPH)
    edge_index = jnp.array([src, dst], dtype=jnp.int32)          # (2, num_edges)
    batch = jnp.repeat(jnp.arange(B, dtype=jnp.int32), NODES_PER_GRAPH)

    run = functools.partial(spatial_encoder, x, edge_index, batch, params,
                            heads=HEADS, hidden=HID, out_channels=OUT_C,
                            num_graphs=B, max_nodes=NODES_PER_GRAPH)
    out_f32 = jax.block_until_ready(run(compute_dtype=jnp.float32))
    out_bf16 = jax.block_until_ready(run(compute_dtype=jnp.bfloat16))

    ref = spatial_encoder_ref(x, edge_index, batch, params,
                              heads=HEADS, hidden=HID, num_graphs=B)
    assert out_f32.shape == (B, OUT_C)
    assert jnp.allclose(out_f32, ref, atol=1e-4, rtol=1e-4), (out_f32, ref)
    assert jnp.allclose(out_bf16, ref, atol=5e-2, rtol=5e-2), (out_bf16, ref)
    print("KERNEL_OK")
</pallas_src>

<mosaic_0001>
module attributes {stable_mosaic.version = 11 : i64} {
  func.func @spatial_encoder_kernel(%arg0: i32, %arg1: memref<1x8x32xf32, #tpu.memory_space<vmem>>, %arg2: memref<1x8x8xbf16, #tpu.memory_space<vmem>>, %arg3: memref<1x1x8xf32, #tpu.memory_space<vmem>>, %arg4: memref<32x64xf32, #tpu.memory_space<vmem>>, %arg5: memref<64x4xf32, #tpu.memory_space<vmem>>, %arg6: memref<4x64xf32, #tpu.memory_space<vmem>>, %arg7: memref<1x64xf32, #tpu.memory_space<vmem>>, %arg8: memref<64x128xf32, #tpu.memory_space<vmem>>, %arg9: memref<1x128xf32, #tpu.memory_space<vmem>>, %arg10: memref<1x128xf32, #tpu.memory_space<vmem>>, %arg11: memref<1x128xf32, #tpu.memory_space<vmem>>, %arg12: memref<1x1x128xf32, #tpu.memory_space<vmem>>) attributes {dimension_semantics = [#tpu.dimension_semantics<parallel>], iteration_bounds = array<i64: 2>, scalar_prefetch = 0 : i64, scratch_operands = 0 : i64, tpu.core_type = #tpu.core_type<tc>, window_params = [{transform_indices = @transform_0, window_bounds = array<i64: 1, 8, 32>}, {transform_indices = @transform_1, window_bounds = array<i64: 1, 8, 8>}, {transform_indices = @transform_2, window_bounds = array<i64: 1, 1, 8>}, {pipeline_mode = #tpu.pipeline_mode<synchronous>, transform_indices = @transform_3, window_bounds = array<i64: 32, 64>}, {pipeline_mode = #tpu.pipeline_mode<synchronous>, transform_indices = @transform_4, window_bounds = array<i64: 64, 4>}, {pipeline_mode = #tpu.pipeline_mode<synchronous>, transform_indices = @transform_5, window_bounds = array<i64: 4, 64>}, {pipeline_mode = #tpu.pipeline_mode<synchronous>, transform_indices = @transform_6, window_bounds = array<i64: 1, 64>}, {pipeline_mode = #tpu.pipeline_mode<synchronous>, transform_indices = @transform_7, window_bounds = array<i64: 64, 128>}, {pipeline_mode = #tpu.pipeline_mode<synchronous>, transform_indices = @transform_8, window_bounds = array<i64: 1, 128>}, {pipeline_mode = #tpu.pipeline_mode<synchronous>, transform_indices = @transform_9, window_bounds = array<i64: 1, 128>}, {pipeline_mode = #tpu.pipeline_mode<synchronous>, transform_indices = @transform_10, window_bounds = array<i64: 1, 128>}, {transform_indices = @transform_11, window_bounds = array<i64: 1, 1, 128>}]} {
    %c0 = arith.constant 0 : index
    %c0_0 = arith.constant 0 : index
    %c0_1 = arith.constant 0 : index
    %0 = vector.load %arg1[%c0, %c0_0, %c0_1] : memref<1x8x32xf32, #tpu.memory_space<vmem>>, vector<1x8x32xf32>
    %1 = vector.shape_cast %0 : vector<1x8x32xf32> to vector<8x32xf32>
    %c0_2 = arith.constant 0 : index
    %c0_3 = arith.constant 0 : index
    %c0_4 = arith.constant 0 : index
    %2 = vector.load %arg2[%c0_2, %c0_3, %c0_4] : memref<1x8x8xbf16, #tpu.memory_space<vmem>>, vector<1x8x8xbf16>
    %3 = vector.shape_cast %2 : vector<1x8x8xbf16> to vector<8x8xbf16>
    %4 = arith.extf %3 : vector<8x8xbf16> to vector<8x8xf32>
    %c0_5 = arith.constant 0 : index
    %c0_6 = arith.constant 0 : index
    %c0_7 = arith.constant 0 : index
    %5 = vector.load %arg3[%c0_5, %c0_6, %c0_7] : memref<1x1x8xf32, #tpu.memory_space<vmem>>, vector<1x1x8xf32>
    %6 = vector.shape_cast %5 : vector<1x1x8xf32> to vector<1x8xf32>
    %c0_8 = arith.constant 0 : index
    %c0_9 = arith.constant 0 : index
    %7 = vector.load %arg4[%c0_8, %c0_9] : memref<32x64xf32, #tpu.memory_space<vmem>>, vector<32x64xf32>
    %cst = arith.constant dense<0.000000e+00> : vector<8x64xf32>
    %8 = tpu.matmul %1, %7, %cst {dimension_numbers = #tpu.dot_dimension_numbers<[1], [0], [0], [1], [0, 0, 1, 1], [], []>} : vector<8x32xf32>, vector<32x64xf32>, vector<8x64xf32> -> vector<8x64xf32>
    %c0_10 = arith.constant 0 : index
    %c0_11 = arith.constant 0 : index
    %9 = vector.load %arg5[%c0_10, %c0_11] : memref<64x4xf32, #tpu.memory_space<vmem>>, vector<64x4xf32>
    %cst_12 = arith.constant dense<0.000000e+00> : vector<8x4xf32>
    %10 = tpu.matmul %8, %9, %cst_12 {dimension_numbers = #tpu.dot_dimension_numbers<[1], [0], [0], [1], [0, 0, 1, 1], [], []>} : vector<8x64xf32>, vector<64x4xf32>, vector<8x4xf32> -> vector<8x4xf32>
    %c0_13 = arith.constant 0 : index
    %c0_14 = arith.constant 0 : index
    %11 = vector.load %arg6[%c0_13, %c0_14] : memref<4x64xf32, #tpu.memory_space<vmem>>, vector<4x64xf32>
    %cst_15 = arith.constant dense<0.000000e+00> : vector<4x8xf32>
    %12 = tpu.matmul %11, %8, %cst_15 {dimension_numbers = #tpu.dot_dimension_numbers<[1], [1], [0], [0], [0, 0, 1, 0], [], []>} : vector<4x64xf32>, vector<8x64xf32>, vector<4x8xf32> -> vector<4x8xf32>
    %13 = vector.extract_strided_slice %10 {offsets = [0, 0], sizes = [8, 1], strides = [1, 1]} : vector<8x4xf32> to vector<8x1xf32>
    %14 = vector.extract_strided_slice %12 {offsets = [0, 0], sizes = [1, 8], strides = [1, 1]} : vector<4x8xf32> to vector<1x8xf32>
    %15 = vector.broadcast %13 : vector<8x1xf32> to vector<8x8xf32>
    %16 = vector.broadcast %14 : vector<1x8xf32> to vector<8x8xf32>
    %17 = arith.addf %15, %16 : vector<8x8xf32>
    %cst_16 = arith.constant 0.000000e+00 : f32
    %18 = vector.broadcast %cst_16 : f32 to vector<8x8xf32>
    %19 = arith.cmpf ogt, %17, %18 : vector<8x8xf32>
    %cst_17 = arith.constant 2.000000e-01 : f32
    %20 = vector.broadcast %cst_17 : f32 to vector<8x8xf32>
    %21 = arith.mulf %20, %17 : vector<8x8xf32>
    %22 = arith.select %19, %17, %21 : vector<8x8xi1>, vector<8x8xf32>
    %23 = arith.addf %22, %4 : vector<8x8xf32>
    %cst_18 = arith.constant dense<0xFF800000> : vector<8xf32>
    %24 = vector.multi_reduction <maximumf>, %23, %cst_18 [1] : vector<8x8xf32> to vector<8xf32>
    %25 = vector.shape_cast %24 : vector<8xf32> to vector<8x1xf32>
    %26 = vector.broadcast %25 : vector<8x1xf32> to vector<8x8xf32>
    %27 = arith.subf %23, %26 : vector<8x8xf32>
    %28 = math.exp %27 : vector<8x8xf32>
    %cst_19 = arith.constant dense<0.000000e+00> : vector<8xf32>
    %29 = vector.multi_reduction <add>, %28, %cst_19 [1] : vector<8x8xf32> to vector<8xf32>
    %30 = vector.shape_cast %29 : vector<8xf32> to vector<8x1xf32>
    %31 = tpu.reciprocal %30 {approx = true} : vector<8x1xf32> -> vector<8x1xf32>
    %32 = arith.mulf %30, %31 : vector<8x1xf32>
    %cst_20 = arith.constant 2.000000e+00 : f32
    %33 = vector.broadcast %cst_20 : f32 to vector<8x1xf32>
    %34 = arith.subf %33, %32 : vector<8x1xf32>
    %35 = arith.mulf %31, %34 : vector<8x1xf32>
    %36 = vector.extract_strided_slice %8 {offsets = [0, 0], sizes = [8, 16], strides = [1, 1]} : vector<8x64xf32> to vector<8x16xf32>
    %cst_21 = arith.constant dense<0.000000e+00> : vector<8x16xf32>
    %37 = tpu.matmul %28, %36, %cst_21 {dimension_numbers = #tpu.dot_dimension_numbers<[1], [0], [0], [1], [0, 0, 1, 1], [], []>} : vector<8x8xf32>, vector<8x16xf32>, vector<8x16xf32> -> vector<8x16xf32>
    %38 = vector.broadcast %35 : vector<8x1xf32> to vector<8x16xf32>
    %39 = arith.mulf %37, %38 : vector<8x16xf32>
    %40 = vector.extract_strided_slice %10 {offsets = [0, 1], sizes = [8, 1], strides = [1, 1]} : vector<8x4xf32> to vector<8x1xf32>
    %41 = vector.extract_strided_slice %12 {offsets = [1, 0], sizes = [1, 8], strides = [1, 1]} : vector<4x8xf32> to vector<1x8xf32>
    %42 = vector.broadcast %40 : vector<8x1xf32> to vector<8x8xf32>
    %43 = vector.broadcast %41 : vector<1x8xf32> to vector<8x8xf32>
    %44 = arith.addf %42, %43 : vector<8x8xf32>
    %cst_22 = arith.constant 0.000000e+00 : f32
    %45 = vector.broadcast %cst_22 : f32 to vector<8x8xf32>
    %46 = arith.cmpf ogt, %44, %45 : vector<8x8xf32>
    %cst_23 = arith.constant 2.000000e-01 : f32
    %47 = vector.broadcast %cst_23 : f32 to vector<8x8xf32>
    %48 = arith.mulf %47, %44 : vector<8x8xf32>
    %49 = arith.select %46, %44, %48 : vector<8x8xi1>, vector<8x8xf32>
    %50 = arith.addf %49, %4 : vector<8x8xf32>
    %cst_24 = arith.constant dense<0xFF800000> : vector<8xf32>
    %51 = vector.multi_reduction <maximumf>, %50, %cst_24 [1] : vector<8x8xf32> to vector<8xf32>
    %52 = vector.shape_cast %51 : vector<8xf32> to vector<8x1xf32>
    %53 = vector.broadcast %52 : vector<8x1xf32> to vector<8x8xf32>
    %54 = arith.subf %50, %53 : vector<8x8xf32>
    %55 = math.exp %54 : vector<8x8xf32>
    %cst_25 = arith.constant dense<0.000000e+00> : vector<8xf32>
    %56 = vector.multi_reduction <add>, %55, %cst_25 [1] : vector<8x8xf32> to vector<8xf32>
    %57 = vector.shape_cast %56 : vector<8xf32> to vector<8x1xf32>
    %58 = tpu.reciprocal %57 {approx = true} : vector<8x1xf32> -> vector<8x1xf32>
    %59 = arith.mulf %57, %58 : vector<8x1xf32>
    %cst_26 = arith.constant 2.000000e+00 : f32
    %60 = vector.broadcast %cst_26 : f32 to vector<8x1xf32>
    %61 = arith.subf %60, %59 : vector<8x1xf32>
    %62 = arith.mulf %58, %61 : vector<8x1xf32>
    %63 = vector.extract_strided_slice %8 {offsets = [0, 16], sizes = [8, 16], strides = [1, 1]} : vector<8x64xf32> to vector<8x16xf32>
    %cst_27 = arith.constant dense<0.000000e+00> : vector<8x16xf32>
    %64 = tpu.matmul %55, %63, %cst_27 {dimension_numbers = #tpu.dot_dimension_numbers<[1], [0], [0], [1], [0, 0, 1, 1], [], []>} : vector<8x8xf32>, vector<8x16xf32>, vector<8x16xf32> -> vector<8x16xf32>
    %65 = vector.broadcast %62 : vector<8x1xf32> to vector<8x16xf32>
    %66 = arith.mulf %64, %65 : vector<8x16xf32>
    %67 = vector.extract_strided_slice %10 {offsets = [0, 2], sizes = [8, 1], strides = [1, 1]} : vector<8x4xf32> to vector<8x1xf32>
    %68 = vector.extract_strided_slice %12 {offsets = [2, 0], sizes = [1, 8], strides = [1, 1]} : vector<4x8xf32> to vector<1x8xf32>
    %69 = vector.broadcast %67 : vector<8x1xf32> to vector<8x8xf32>
    %70 = vector.broadcast %68 : vector<1x8xf32> to vector<8x8xf32>
    %71 = arith.addf %69, %70 : vector<8x8xf32>
    %cst_28 = arith.constant 0.000000e+00 : f32
    %72 = vector.broadcast %cst_28 : f32 to vector<8x8xf32>
    %73 = arith.cmpf ogt, %71, %72 : vector<8x8xf32>
    %cst_29 = arith.constant 2.000000e-01 : f32
    %74 = vector.broadcast %cst_29 : f32 to vector<8x8xf32>
    %75 = arith.mulf %74, %71 : vector<8x8xf32>
    %76 = arith.select %73, %71, %75 : vector<8x8xi1>, vector<8x8xf32>
    %77 = arith.addf %76, %4 : vector<8x8xf32>
    %cst_30 = arith.constant dense<0xFF800000> : vector<8xf32>
    %78 = vector.multi_reduction <maximumf>, %77, %cst_30 [1] : vector<8x8xf32> to vector<8xf32>
    %79 = vector.shape_cast %78 : vector<8xf32> to vector<8x1xf32>
    %80 = vector.broadcast %79 : vector<8x1xf32> to vector<8x8xf32>
    %81 = arith.subf %77, %80 : vector<8x8xf32>
    %82 = math.exp %81 : vector<8x8xf32>
    %cst_31 = arith.constant dense<0.000000e+00> : vector<8xf32>
    %83 = vector.multi_reduction <add>, %82, %cst_31 [1] : vector<8x8xf32> to vector<8xf32>
    %84 = vector.shape_cast %83 : vector<8xf32> to vector<8x1xf32>
    %85 = tpu.reciprocal %84 {approx = true} : vector<8x1xf32> -> vector<8x1xf32>
    %86 = arith.mulf %84, %85 : vector<8x1xf32>
    %cst_32 = arith.constant 2.000000e+00 : f32
    %87 = vector.broadcast %cst_32 : f32 to vector<8x1xf32>
    %88 = arith.subf %87, %86 : vector<8x1xf32>
    %89 = arith.mulf %85, %88 : vector<8x1xf32>
    %90 = vector.extract_strided_slice %8 {offsets = [0, 32], sizes = [8, 16], strides = [1, 1]} : vector<8x64xf32> to vector<8x16xf32>
    %cst_33 = arith.constant dense<0.000000e+00> : vector<8x16xf32>
    %91 = tpu.matmul %82, %90, %cst_33 {dimension_numbers = #tpu.dot_dimension_numbers<[1], [0], [0], [1], [0, 0, 1, 1], [], []>} : vector<8x8xf32>, vector<8x16xf32>, vector<8x16xf32> -> vector<8x16xf32>
    %92 = vector.broadcast %89 : vector<8x1xf32> to vector<8x16xf32>
    %93 = arith.mulf %91, %92 : vector<8x16xf32>
    %94 = vector.extract_strided_slice %10 {offsets = [0, 3], sizes = [8, 1], strides = [1, 1]} : vector<8x4xf32> to vector<8x1xf32>
    %95 = vector.extract_strided_slice %12 {offsets = [3, 0], sizes = [1, 8], strides = [1, 1]} : vector<4x8xf32> to vector<1x8xf32>
    %96 = vector.broadcast %94 : vector<8x1xf32> to vector<8x8xf32>
    %97 = vector.broadcast %95 : vector<1x8xf32> to vector<8x8xf32>
    %98 = arith.addf %96, %97 : vector<8x8xf32>
    %cst_34 = arith.constant 0.000000e+00 : f32
    %99 = vector.broadcast %cst_34 : f32 to vector<8x8xf32>
    %100 = arith.cmpf ogt, %98, %99 : vector<8x8xf32>
    %cst_35 = arith.constant 2.000000e-01 : f32
    %101 = vector.broadcast %cst_35 : f32 to vector<8x8xf32>
    %102 = arith.mulf %101, %98 : vector<8x8xf32>
    %103 = arith.select %100, %98, %102 : vector<8x8xi1>, vector<8x8xf32>
    %104 = arith.addf %103, %4 : vector<8x8xf32>
    %cst_36 = arith.constant dense<0xFF800000> : vector<8xf32>
    %105 = vector.multi_reduction <maximumf>, %104, %cst_36 [1] : vector<8x8xf32> to vector<8xf32>
    %106 = vector.shape_cast %105 : vector<8xf32> to vector<8x1xf32>
    %107 = vector.broadcast %106 : vector<8x1xf32> to vector<8x8xf32>
    %108 = arith.subf %104, %107 : vector<8x8xf32>
    %109 = math.exp %108 : vector<8x8xf32>
    %cst_37 = arith.constant dense<0.000000e+00> : vector<8xf32>
    %110 = vector.multi_reduction <add>, %109, %cst_37 [1] : vector<8x8xf32> to vector<8xf32>
    %111 = vector.shape_cast %110 : vector<8xf32> to vector<8x1xf32>
    %112 = tpu.reciprocal %111 {approx = true} : vector<8x1xf32> -> vector<8x1xf32>
    %113 = arith.mulf %111, %112 : vector<8x1xf32>
    %cst_38 = arith.constant 2.000000e+00 : f32
    %114 = vector.broadcast %cst_38 : f32 to vector<8x1xf32>
    %115 = arith.subf %114, %113 : vector<8x1xf32>
    %116 = arith.mulf %112, %115 : vector<8x1xf32>
    %117 = vector.extract_strided_slice %8 {offsets = [0, 48], sizes = [8, 16], strides = [1, 1]} : vector<8x64xf32> to vector<8x16xf32>
    %cst_39 = arith.constant dense<0.000000e+00> : vector<8x16xf32>
    %118 = tpu.matmul %109, %117, %cst_39 {dimension_numbers = #tpu.dot_dimension_numbers<[1], [0], [0], [1], [0, 0, 1, 1], [], []>} : vector<8x8xf32>, vector<8x16xf32>, vector<8x16xf32> -> vector<8x16xf32>
    %119 = vector.broadcast %116 : vector<8x1xf32> to vector<8x16xf32>
    %120 = arith.mulf %118, %119 : vector<8x16xf32>
    %121 = tpu.concatenate %39, %66, %93, %120 in 1 : vector<8x16xf32>, vector<8x16xf32>, vector<8x16xf32>, vector<8x16xf32> -> vector<8x64xf32>
    %c0_40 = arith.constant 0 : index
    %c0_41 = arith.constant 0 : index
    %122 = vector.load %arg7[%c0_40, %c0_41] : memref<1x64xf32, #tpu.memory_space<vmem>>, vector<1x64xf32>
    %123 = vector.broadcast %122 : vector<1x64xf32> to vector<8x64xf32>
    %124 = arith.addf %121, %123 : vector<8x64xf32>
    %cst_42 = arith.constant 0.000000e+00 : f32
    %125 = vector.broadcast %cst_42 : f32 to vector<8x64xf32>
    %126 = arith.maximumf %124, %125 : vector<8x64xf32>
    %c0_43 = arith.constant 0 : index
    %c0_44 = arith.constant 0 : index
    %127 = vector.load %arg8[%c0_43, %c0_44] : memref<64x128xf32, #tpu.memory_space<vmem>>, vector<64x128xf32>
    %cst_45 = arith.constant dense<0.000000e+00> : vector<8x128xf32>
    %128 = tpu.matmul %126, %127, %cst_45 {dimension_numbers = #tpu.dot_dimension_numbers<[1], [0], [0], [1], [0, 0, 1, 1], [], []>} : vector<8x64xf32>, vector<64x128xf32>, vector<8x128xf32> -> vector<8x128xf32>
    %c0_46 = arith.constant 0 : index
    %c0_47 = arith.constant 0 : index
    %129 = vector.load %arg9[%c0_46, %c0_47] : memref<1x128xf32, #tpu.memory_space<vmem>>, vector<1x128xf32>
    %130 = vector.broadcast %129 : vector<1x128xf32> to vector<8x128xf32>
    %131 = arith.mulf %128, %130 : vector<8x128xf32>
    %cst_48 = arith.constant dense<0.000000e+00> : vector<8xf32>
    %132 = vector.multi_reduction <add>, %131, %cst_48 [1] : vector<8x128xf32> to vector<8xf32>
    %133 = vector.shape_cast %132 : vector<8xf32> to vector<8x1xf32>
    %c0_49 = arith.constant 0 : index
    %c0_50 = arith.constant 0 : index
    %134 = vector.load %arg10[%c0_49, %c0_50] : memref<1x128xf32, #tpu.memory_space<vmem>>, vector<1x128xf32>
    %cst_51 = arith.constant dense<0.000000e+00> : vector<1x8xf32>
    %135 = tpu.matmul %134, %128, %cst_51 {dimension_numbers = #tpu.dot_dimension_numbers<[1], [1], [0], [0], [0, 0, 1, 0], [], []>} : vector<1x128xf32>, vector<8x128xf32>, vector<1x8xf32> -> vector<1x8xf32>
    %136 = vector.broadcast %133 : vector<8x1xf32> to vector<8x8xf32>
    %137 = vector.broadcast %135 : vector<1x8xf32> to vector<8x8xf32>
    %138 = arith.addf %136, %137 : vector<8x8xf32>
    %cst_52 = arith.constant 0.000000e+00 : f32
    %139 = vector.broadcast %cst_52 : f32 to vector<8x8xf32>
    %140 = arith.cmpf ogt, %138, %139 : vector<8x8xf32>
    %cst_53 = arith.constant 2.000000e-01 : f32
    %141 = vector.broadcast %cst_53 : f32 to vector<8x8xf32>
    %142 = arith.mulf %141, %138 : vector<8x8xf32>
    %143 = arith.select %140, %138, %142 : vector<8x8xi1>, vector<8x8xf32>
    %144 = arith.addf %143, %4 : vector<8x8xf32>
    %cst_54 = arith.constant dense<0xFF800000> : vector<8xf32>
    %145 = vector.multi_reduction <maximumf>, %144, %cst_54 [1] : vector<8x8xf32> to vector<8xf32>
    %146 = vector.shape_cast %145 : vector<8xf32> to vector<8x1xf32>
    %147 = vector.broadcast %146 : vector<8x1xf32> to vector<8x8xf32>
    %148 = arith.subf %144, %147 : vector<8x8xf32>
    %149 = math.exp %148 : vector<8x8xf32>
    %cst_55 = arith.constant dense<0.000000e+00> : vector<8xf32>
    %150 = vector.multi_reduction <add>, %149, %cst_55 [1] : vector<8x8xf32> to vector<8xf32>
    %151 = vector.shape_cast %150 : vector<8xf32> to vector<8x1xf32>
    %152 = tpu.reciprocal %151 {approx = true} : vector<8x1xf32> -> vector<8x1xf32>
    %153 = arith.mulf %151, %152 : vector<8x1xf32>
    %cst_56 = arith.constant 2.000000e+00 : f32
    %154 = vector.broadcast %cst_56 : f32 to vector<8x1xf32>
    %155 = arith.subf %154, %153 : vector<8x1xf32>
    %156 = arith.mulf %152, %155 : vector<8x1xf32>
    %cst_57 = arith.constant dense<0.000000e+00> : vector<8x128xf32>
    %157 = tpu.matmul %149, %128, %cst_57 {dimension_numbers = #tpu.dot_dimension_numbers<[1], [0], [0], [1], [0, 0, 1, 1], [], []>} : vector<8x8xf32>, vector<8x128xf32>, vector<8x128xf32> -> vector<8x128xf32>
    %158 = vector.broadcast %156 : vector<8x1xf32> to vector<8x128xf32>
    %159 = arith.mulf %157, %158 : vector<8x128xf32>
    %c0_58 = arith.constant 0 : index
    %c0_59 = arith.constant 0 : index
    %160 = vector.load %arg11[%c0_58, %c0_59] : memref<1x128xf32, #tpu.memory_space<vmem>>, vector<1x128xf32>
    %161 = vector.broadcast %160 : vector<1x128xf32> to vector<8x128xf32>
    %162 = arith.addf %159, %161 : vector<8x128xf32>
    %cst_60 = arith.constant dense<0.000000e+00> : vector<1x128xf32>
    %163 = tpu.matmul %6, %162, %cst_60 {dimension_numbers = #tpu.dot_dimension_numbers<[1], [0], [0], [1], [0, 0, 1, 1], [], []>} : vector<1x8xf32>, vector<8x128xf32>, vector<1x128xf32> -> vector<1x128xf32>
    %c0_61 = arith.constant 0 : index
    %c0_62 = arith.constant 0 : index
    %c0_63 = arith.constant 0 : index
    %164 = vector.load %arg12[%c0_61, %c0_62, %c0_63] : memref<1x1x128xf32, #tpu.memory_space<vmem>>, vector<1x1x128xf32>
    %165 = vector.shape_cast %164 : vector<1x1x128xf32> to vector<1x128xf32>
    %166 = vector.shape_cast %163 : vector<1x128xf32> to vector<1x1x128xf32>
    tpu.vector_store %arg12[%c0_61, %c0_62, %c0_63], %166 {strides = array<i32>} : memref<1x1x128xf32, #tpu.memory_space<vmem>>, vector<1x1x128xf32>,
    return
  }
  func.func @transform_0(%arg0: i32) -> (i32, i32, i32) {
    %c0_i32 = arith.constant 0 : i32
    %c0_i32_0 = arith.constant 0 : i32
    %c0_i32_1 = arith.constant 0 : i32
    return %arg0, %c0_i32, %c0_i32_0 : i32, i32, i32
  }
  func.func @transform_1(%arg0: i32) -> (i32, i32, i32) {
    %c0_i32 = arith.constant 0 : i32
    %c0_i32_0 = arith.constant 0 : i32
    %c0_i32_1 = arith.constant 0 : i32
    return %arg0, %c0_i32, %c0_i32_0 : i32, i32, i32
  }
  func.func @transform_2(%arg0: i32) -> (i32, i32, i32) {
    %c0_i32 = arith.constant 0 : i32
    %c0_i32_0 = arith.constant 0 : i32
    %c0_i32_1 = arith.constant 0 : i32
    return %arg0, %c0_i32, %c0_i32_0 : i32, i32, i32
  }
  func.func @transform_3(%arg0: i32) -> (i32, i32) {
    %c0_i32 = arith.constant 0 : i32
    %c0_i32_0 = arith.constant 0 : i32
    %c0_i32_1 = arith.constant 0 : i32
    return %c0_i32, %c0_i32_0 : i32, i32
  }
  func.func @transform_4(%arg0: i32) -> (i32, i32) {
    %c0_i32 = arith.constant 0 : i32
    %c0_i32_0 = arith.constant 0 : i32
    %c0_i32_1 = arith.constant 0 : i32
    return %c0_i32, %c0_i32_0 : i32, i32
  }
  func.func @transform_5(%arg0: i32) -> (i32, i32) {
    %c0_i32 = arith.constant 0 : i32
    %c0_i32_0 = arith.constant 0 : i32
    %c0_i32_1 = arith.constant 0 : i32
    return %c0_i32, %c0_i32_0 : i32, i32
  }
  func.func @transform_6(%arg0: i32) -> (i32, i32) {
    %c0_i32 = arith.constant 0 : i32
    %c0_i32_0 = arith.constant 0 : i32
    %c0_i32_1 = arith.constant 0 : i32
    return %c0_i32, %c0_i32_0 : i32, i32
  }
  func.func @transform_7(%arg0: i32) -> (i32, i32) {
    %c0_i32 = arith.constant 0 : i32
    %c0_i32_0 = arith.constant 0 : i32
    %c0_i32_1 = arith.constant 0 : i32
    return %c0_i32, %c0_i32_0 : i32, i32
  }
  func.func @transform_8(%arg0: i32) -> (i32, i32) {
    %c0_i32 = arith.constant 0 : i32
    %c0_i32_0 = arith.constant 0 : i32
    %c0_i32_1 = arith.constant 0 : i32
    return %c0_i32, %c0_i32_0 : i32, i32
  }
  func.func @transform_9(%arg0: i32) -> (i32, i32) {
    %c0_i32 = arith.constant 0 : i32
    %c0_i32_0 = arith.constant 0 : i32
    %c0_i32_1 = arith.constant 0 : i32
    return %c0_i32, %c0_i32_0 : i32, i32
  }
  func.func @transform_10(%arg0: i32) -> (i32, i32) {
    %c0_i32 = arith.constant 0 : i32
    %c0_i32_0 = arith.constant 0 : i32
    %c0_i32_1 = arith.constant 0 : i32
    return %c0_i32, %c0_i32_0 : i32, i32
  }
  func.func @transform_11(%arg0: i32) -> (i32, i32, i32) {
    %c0_i32 = arith.constant 0 : i32
    %c0_i32_0 = arith.constant 0 : i32
    %c0_i32_1 = arith.constant 0 : i32
    return %arg0, %c0_i32, %c0_i32_0 : i32, i32, i32
  }
}

</mosaic_0001>

<llo_original>
// kernel: tpu_custom_call.1
$region0: #{tpu_custom_call.1}
  #allocation0 [shape = 'u32[]', space=smem, size = 0x4, offset = 0x4, fixed_abs, tag = 'smem constant byte address 0x4 - core index']
  #allocation1 [shape = 'u32[72,128]{1,0:T(1,128)}', space=vmem, size = 0x9000, scoped, tag = 'internal scratch']
  %s0 = inlined_call_operand.hbm [shape: f32[2,8,32], index: 0, kind: input, shape index: {}]
  %s1 = inlined_call_operand.vmem [shape: bf16[2,8,8], index: 1, kind: input, shape index: {}]
  %s2 = inlined_call_operand.vmem [shape: f32[2,1,8], index: 2, kind: input, shape index: {}]
  %s3 = inlined_call_operand.hbm [shape: f32[32,64], index: 3, kind: input, shape index: {}]
  %s4 = inlined_call_operand.vmem [shape: f32[64,4], index: 4, kind: input, shape index: {}]
  %s5 = inlined_call_operand.hbm [shape: f32[4,64], index: 5, kind: input, shape index: {}]
  %s6 = inlined_call_operand.hbm [shape: f32[1,64], index: 6, kind: input, shape index: {}]
  %s7 = inlined_call_operand.vmem [shape: f32[64,128], index: 7, kind: input, shape index: {}]
  %s8 = inlined_call_operand.vmem [shape: f32[1,128], index: 8, kind: input, shape index: {}]
  %s9 = inlined_call_operand.vmem [shape: f32[1,128], index: 9, kind: input, shape index: {}]
  %s10 = inlined_call_operand.vmem [shape: f32[1,128], index: 10, kind: input, shape index: {}]
  %s11 = inlined_call_operand.hbm [shape: f32[2,1,128], index: 11, kind: output, shape index: {}]
  %s12 = sld [smem:[#allocation0]]
  $region93: #{tpu_custom_call.1} parent=0
    _
  %s14 = ssub.s32 1, %s12
  %s15 = scalar_select 0, %s14, %s12
  $region1: #{tpu_custom_call.1} parent=0
    #allocation2 [shape = 'u8[8192]{0}', space=vmem, size = 0x2000, scoped, tag = 'input window, operand 0']
    #allocation3 [shape = 's32[2]{0}', space=sflag, size = 0x8, scoped, tag = 'scoped memory for tpu_custom_call.1']
    #allocation4 [shape = 's32[2]{0}', space=sflag, size = 0x8, scoped, tag = 'scoped memory for tpu_custom_call.1']
    #allocation5 [shape = 'u8[16384]{0}', space=vmem, size = 0x4000, scoped, tag = 'input window, operand 3, single buffered']
    #allocation6 [shape = 's32[1]{0}', space=sflag, size = 0x4, scoped, tag = 'scoped memory for tpu_custom_call.1']
    #allocation7 [shape = 'u8[2048]{0}', space=vmem, size = 0x800, scoped, tag = 'input window, operand 5, single buffered']
    #allocation8 [shape = 'u8[512]{0}', space=vmem, size = 0x400, scoped, tag = 'input window, operand 6, single buffered']
    #allocation9 [shape = 's32[1]{0}', space=sflag, size = 0x4, scoped, tag = 'scoped memory for tpu_custom_call.1']
    #allocation10 [shape = 'u8[1024]{0}', space=vmem, size = 0x400, scoped, tag = 'output window, operand 0']
    %16 = vsyncpa [#allocation3], 0
    %s17 = scalar_lea.sflag [#allocation3], 1
    %18 = vsyncpa %s17, 0
    %19 = vsyncpa [#allocation6], 0
    %20 = vsyncpa [#allocation9], 0
    %21 = vsyncpa [#allocation4], 0
    %s22 = scalar_lea.sflag [#allocation4], 1
    %23 = vsyncpa %s22, 0
    loop: start=0, step=1, limit=4
    $region2: #{tpu_custom_call.1} parent=1 // loop_pre_header
      _
    $region3: #{tpu_custom_call.1} parent=1 // loop_header
      %s25 = sphi 0, %s29
      %p26 = scmp.ge.s32.totalorder %s25, 4
      %s35 = sphi 0, %s37
      %s38 = sphi 0, %s35
      %s39 = sphi 0, %s38
      %s55 = sphi 0, %s39
      %s61 = sphi 0, %s63
      %s64 = sphi 0, %s61
      %s65 = sphi 0, %s64
      %s81 = sphi 0, %s65
      %s87 = sphi 0, %s89
      %s90 = sphi 0, %s87
      %s91 = sphi 0, %s90
      %s107 = sphi 0, %s91
      %s111 = sphi 0, %s111
      %s113 = sphi 0, %s111
      %s114 = sphi 0, %s113
      %s128 = sphi 0, %s114
      %s132 = sphi 0, %s132
      %s134 = sphi 0, %s132
      %s135 = sphi 0, %s134
      %s149 = sphi 0, %s135
      %s153 = sphi 0, %s153
      %s155 = sphi 0, %s153
      %s156 = sphi 0, %s155
      %s170 = sphi 0, %s156
      %s174 = sphi 0, %s174
      %s176 = sphi 0, %s174
      %s177 = sphi 0, %s176
      %s191 = sphi 0, %s177
      %s195 = sphi 0, %s195
      %s197 = sphi 0, %s195
      %s198 = sphi 0, %s197
      %s212 = sphi 0, %s198
      %s216 = sphi 0, %s216
      %s218 = sphi 0, %s216
      %s219 = sphi 0, %s218
      %s233 = sphi 0, %s219
      %s237 = sphi 0, %s237
      %s239 = sphi 0, %s237
      %s240 = sphi 0, %s239
      %s254 = sphi 0, %s240
      %s258 = sphi 0, %s258
      %s260 = sphi 0, %s258
      %s261 = sphi 0, %s260
      %s275 = sphi 0, %s261
      %s281 = sphi 0, %s283
      %s284 = sphi 0, %s281
      %s285 = sphi 0, %s284
      %s301 = sphi 0, %s285
    $region4: #{tpu_custom_call.1} parent=1 // loop_header_branch
      %28 = sbr.rel (%p26) target = $region8
    $region5: #{tpu_custom_call.1} parent=1 // loop_body
      %s30 = ssub.s32 %s25, 1
      %s31 = ssub.s32 %s25, 2
      %s32 = sadd.s32 %s25, 1
      %s33 = ssub.s32 %s25, %s32
      %p34 = scmp.eq.s32.totalorder %s33, 0
      %s36 = sadd.s32 %s35, 1
      %s37 = scalar_select %p34, %s35, %s36
      %p40 = pneg %p34
      %p41 = scmp.eq.s32.totalorder %s25, 1
      %p42 = por %p40, %p41
      %p43 = scmp.ne.s32.totalorder %s35, %s38
      %p44 = scmp.eq.s32.totalorder %s25, 0
      %p45 = por %p43, %p44
      %p46 = scmp.ne.s32.totalorder %s35, %s38
      %p47 = scmp.eq.s32.totalorder %s30, 1
      %p48 = por %p46, %p47
      %p49 = scmp.ne.s32.totalorder %s38, %s39
      %p50 = scmp.eq.s32.totalorder %s30, 0
      %p51 = por %p49, %p50
      %p52 = scmp.ne.s32.totalorder %s38, %s39
      %p53 = scmp.eq.s32.totalorder %s31, 1
      %p54 = por %p52, %p53
      %p56 = scmp.ne.s32.totalorder %s39, %s55
      %p57 = scmp.eq.s32.totalorder %s31, 0
      %p58 = por %p56, %p57
      %s59 = ssub.s32 %s25, %s32
      %p60 = scmp.eq.s32.totalorder %s59, 0
      %s62 = sadd.s32 %s61, 1
      %s63 = scalar_select %p60, %s61, %s62
      %p66 = pneg %p60
      %p67 = scmp.eq.s32.totalorder %s25, 1
      %p68 = por %p66, %p67
      %p69 = scmp.ne.s32.totalorder %s61, %s64
      %p70 = scmp.eq.s32.totalorder %s25, 0
      %p71 = por %p69, %p70
      %p72 = scmp.ne.s32.totalorder %s61, %s64
      %p73 = scmp.eq.s32.totalorder %s30, 1
      %p74 = por %p72, %p73
      %p75 = scmp.ne.s32.totalorder %s64, %s65
      %p76 = scmp.eq.s32.totalorder %s30, 0
      %p77 = por %p75, %p76
      %p78 = scmp.ne.s32.totalorder %s64, %s65
      %p79 = scmp.eq.s32.totalorder %s31, 1
      %p80 = por %p78, %p79
      %p82 = scmp.ne.s32.totalorder %s65, %s81
      %p83 = scmp.eq.s32.totalorder %s31, 0
      %p84 = por %p82, %p83
      %s85 = ssub.s32 %s25, %s32
      %p86 = scmp.eq.s32.totalorder %s85, 0
      %s88 = sadd.s32 %s87, 1
      %s89 = scalar_select %p86, %s87, %s88
      %p92 = pneg %p86
      %p93 = scmp.eq.s32.totalorder %s25, 1
      %p94 = por %p92, %p93
      %p95 = scmp.ne.s32.totalorder %s87, %s90
      %p96 = scmp.eq.s32.totalorder %s25, 0
      %p97 = por %p95, %p96
      %p98 = scmp.ne.s32.totalorder %s87, %s90
      %p99 = scmp.eq.s32.totalorder %s30, 1
      %p100 = por %p98, %p99
      %p101 = scmp.ne.s32.totalorder %s90, %s91
      %p102 = scmp.eq.s32.totalorder %s30, 0
      %p103 = por %p101, %p102
      %p104 = scmp.ne.s32.totalorder %s90, %s91
      %p105 = scmp.eq.s32.totalorder %s31, 1
      %p106 = por %p104, %p105
      %p108 = scmp.ne.s32.totalorder %s91, %s107
      %p109 = scmp.eq.s32.totalorder %s31, 0
      %p110 = por %p108, %p109
      %s112 = sadd.s32 %s111, 1
      %p115 = scmp.eq.s32.totalorder %s25, 1
      %p116 = scmp.ne.s32.totalorder %s111, %s113
      %p117 = scmp.eq.s32.totalorder %s25, 0
      %p118 = por %p116, %p117
      %p119 = scmp.ne.s32.totalorder %s111, %s113
      %p120 = scmp.eq.s32.totalorder %s30, 1
      %p121 = por %p119, %p120
      %p122 = scmp.ne.s32.totalorder %s113, %s114
      %p123 = scmp.eq.s32.totalorder %s30, 0
      %p124 = por %p122, %p123
      %p125 = scmp.ne.s32.totalorder %s113, %s114
      %p126 = scmp.eq.s32.totalorder %s31, 1
      %p127 = por %p125, %p126
      %p129 = scmp.ne.s32.totalorder %s114, %s128
      %p130 = scmp.eq.s32.totalorder %s31, 0
      %p131 = por %p129, %p130
      %s133 = sadd.s32 %s132, 1
      %p136 = scmp.eq.s32.totalorder %s25, 1
      %p137 = scmp.ne.s32.totalorder %s132, %s134
      %p138 = scmp.eq.s32.totalorder %s25, 0
      %p139 = por %p137, %p138
      %p140 = scmp.ne.s32.totalorder %s132, %s134
      %p141 = scmp.eq.s32.totalorder %s30, 1
      %p142 = por %p140, %p141
      %p143 = scmp.ne.s32.totalorder %s134, %s135
      %p144 = scmp.eq.s32.totalorder %s30, 0
      %p145 = por %p143, %p144
      %p146 = scmp.ne.s32.totalorder %s134, %s135
      %p147 = scmp.eq.s32.totalorder %s31, 1
      %p148 = por %p146, %p147
      %p150 = scmp.ne.s32.totalorder %s135, %s149
      %p151 = scmp.eq.s32.totalorder %s31, 0
      %p152 = por %p150, %p151
      %s154 = sadd.s32 %s153, 1
      %p157 = scmp.eq.s32.totalorder %s25, 1
      %p158 = scmp.ne.s32.totalorder %s153, %s155
      %p159 = scmp.eq.s32.totalorder %s25, 0
      %p160 = por %p158, %p159
      %p161 = scmp.ne.s32.totalorder %s153, %s155
      %p162 = scmp.eq.s32.totalorder %s30, 1
      %p163 = por %p161, %p162
      %p164 = scmp.ne.s32.totalorder %s155, %s156
      %p165 = scmp.eq.s32.totalorder %s30, 0
      %p166 = por %p164, %p165
      %p167 = scmp.ne.s32.totalorder %s155, %s156
      %p168 = scmp.eq.s32.totalorder %s31, 1
      %p169 = por %p167, %p168
      %p171 = scmp.ne.s32.totalorder %s156, %s170
      %p172 = scmp.eq.s32.totalorder %s31, 0
      %p173 = por %p171, %p172
      %s175 = sadd.s32 %s174, 1
      %p178 = scmp.eq.s32.totalorder %s25, 1
      %p179 = scmp.ne.s32.totalorder %s174, %s176
      %p180 = scmp.eq.s32.totalorder %s25, 0
      %p181 = por %p179, %p180
      %p182 = scmp.ne.s32.totalorder %s174, %s176
      %p183 = scmp.eq.s32.totalorder %s30, 1
      %p184 = por %p182, %p183
      %p185 = scmp.ne.s32.totalorder %s176, %s177
      %p186 = scmp.eq.s32.totalorder %s30, 0
      %p187 = por %p185, %p186
      %p188 = scmp.ne.s32.totalorder %s176, %s177
      %p189 = scmp.eq.s32.totalorder %s31, 1
      %p190 = por %p188, %p189
      %p192 = scmp.ne.s32.totalorder %s177, %s191
      %p193 = scmp.eq.s32.totalorder %s31, 0
      %p194 = por %p192, %p193
      %s196 = sadd.s32 %s195, 1
      %p199 = scmp.eq.s32.totalorder %s25, 1
      %p200 = scmp.ne.s32.totalorder %s195, %s197
      %p201 = scmp.eq.s32.totalorder %s25, 0
      %p202 = por %p200, %p201
      %p203 = scmp.ne.s32.totalorder %s195, %s197
      %p204 = scmp.eq.s32.totalorder %s30, 1
      %p205 = por %p203, %p204
      %p206 = scmp.ne.s32.totalorder %s197, %s198
      %p207 = scmp.eq.s32.totalorder %s30, 0
      %p208 = por %p206, %p207
      %p209 = scmp.ne.s32.totalorder %s197, %s198
      %p210 = scmp.eq.s32.totalorder %s31, 1
      %p211 = por %p209, %p210
      %p213 = scmp.ne.s32.totalorder %s198, %s212
      %p214 = scmp.eq.s32.totalorder %s31, 0
      %p215 = por %p213, %p214
      %s217 = sadd.s32 %s216, 1
      %p220 = scmp.eq.s32.totalorder %s25, 1
      %p221 = scmp.ne.s32.totalorder %s216, %s218
      %p222 = scmp.eq.s32.totalorder %s25, 0
      %p223 = por %p221, %p222
      %p224 = scmp.ne.s32.totalorder %s216, %s218
      %p225 = scmp.eq.s32.totalorder %s30, 1
      %p226 = por %p224, %p225
      %p227 = scmp.ne.s32.totalorder %s218, %s219
      %p228 = scmp.eq.s32.totalorder %s30, 0
      %p229 = por %p227, %p228
      %p230 = scmp.ne.s32.totalorder %s218, %s219
      %p231 = scmp.eq.s32.totalorder %s31, 1
      %p232 = por %p230, %p231
      %p234 = scmp.ne.s32.totalorder %s219, %s233
      %p235 = scmp.eq.s32.totalorder %s31, 0
      %p236 = por %p234, %p235
      %s238 = sadd.s32 %s237, 1
      %p241 = scmp.eq.s32.totalorder %s25, 1
      %p242 = scmp.ne.s32.totalorder %s237, %s239
      %p243 = scmp.eq.s32.totalorder %s25, 0
      %p244 = por %p242, %p243
      %p245 = scmp.ne.s32.totalorder %s237, %s239
      %p246 = scmp.eq.s32.totalorder %s30, 1
      %p247 = por %p245, %p246
      %p248 = scmp.ne.s32.totalorder %s239, %s240
      %p249 = scmp.eq.s32.totalorder %s30, 0
      %p250 = por %p248, %p249
      %p251 = scmp.ne.s32.totalorder %s239, %s240
      %p252 = scmp.eq.s32.totalorder %s31, 1
      %p253 = por %p251, %p252
      %p255 = scmp.ne.s32.totalorder %s240, %s254
      %p256 = scmp.eq.s32.totalorder %s31, 0
      %p257 = por %p255, %p256
      %s259 = sadd.s32 %s258, 1
      %p262 = scmp.eq.s32.totalorder %s25, 1
      %p263 = scmp.ne.s32.totalorder %s258, %s260
      %p264 = scmp.eq.s32.totalorder %s25, 0
      %p265 = por %p263, %p264
      %p266 = scmp.ne.s32.totalorder %s258, %s260
      %p267 = scmp.eq.s32.totalorder %s30, 1
      %p268 = por %p266, %p267
      %p269 = scmp.ne.s32.totalorder %s260, %s261
      %p270 = scmp.eq.s32.totalorder %s30, 0
      %p271 = por %p269, %p270
      %p272 = scmp.ne.s32.totalorder %s260, %s261
      %p273 = scmp.eq.s32.totalorder %s31, 1
      %p274 = por %p272, %p273
      %p276 = scmp.ne.s32.totalorder %s261, %s275
      %p277 = scmp.eq.s32.totalorder %s31, 0
      %p278 = por %p276, %p277
      %s279 = ssub.s32 %s25, %s32
      %p280 = scmp.eq.s32.totalorder %s279, 0
      %s282 = sadd.s32 %s281, 1
      %s283 = scalar_select %p280, %s281, %s282
      %p286 = pneg %p280
      %p287 = scmp.eq.s32.totalorder %s25, 1
      %p288 = por %p286, %p287
      %p289 = scmp.ne.s32.totalorder %s281, %s284
      %p290 = scmp.eq.s32.totalorder %s25, 0
      %p291 = por %p289, %p290
      %p292 = scmp.ne.s32.totalorder %s281, %s284
      %p293 = scmp.eq.s32.totalorder %s30, 1
      %p294 = por %p292, %p293
      %p295 = scmp.ne.s32.totalorder %s284, %s285
      %p296 = scmp.eq.s32.totalorder %s30, 0
      %p297 = por %p295, %p296
      %p298 = scmp.ne.s32.totalorder %s284, %s285
      %p299 = scmp.eq.s32.totalorder %s31, 1
      %p300 = por %p298, %p299
      %p302 = scmp.ne.s32.totalorder %s285, %s301
      %p303 = scmp.eq.s32.totalorder %s31, 0
      %p304 = por %p302, %p303
      %p305 = scmp.le.s32.totalorder 1, %s25
      %p306 = scmp.lt.s32.totalorder %s25, 3
      %p307 = pnand %p305, %p306
      %p308 = pneg %p307
      // Predicated region
      $region9: #{tpu_custom_call.1} parent=5 // pred_check
        _
      $region10: #{tpu_custom_call.1} parent=5 // pred_check_branch
        %310 = sbr.rel (%p307) target = $region12
      $region11: #{tpu_custom_call.1} parent=5 // pred_region
        %s311 = ssub.s32 %s25, 1
        // Predicated region
        $region13: #{tpu_custom_call.1} parent=11 // pred_check
          %p312 = pneg %p124
        $region14: #{tpu_custom_call.1} parent=11 // pred_check_branch
          %314 = sbr.rel (%p312) target = $region16
        $region15: #{tpu_custom_call.1} parent=11 // pred_region
          %316 = vsyncadd [#allocation6], 0
          %s317 = sshll.u32 %s3, 4
          %s318 = int_to_ptr.hbm [resolvable:$true] %s317
          %s319 = sshll.u32 [#allocation5], 4
          %s320 = int_to_ptr.vmem [resolvable:$true] %s319
          %325 = dma.hbm_to_vmem [thread:$0]  %s318, 512, %s320, [#allocation6], 128, 128, 8
        $region16: #{tpu_custom_call.1} parent=11 // pred_fallthru
          _
        // Predicated region
        $region17: #{tpu_custom_call.1} parent=11 // pred_check
          %p326 = pneg %p145
        $region18: #{tpu_custom_call.1} parent=11 // pred_check_branch
          %328 = sbr.rel (%p326) target = $region20
        $region19: #{tpu_custom_call.1} parent=11 // pred_region
          _
        $region20: #{tpu_custom_call.1} parent=11 // pred_fallthru
          _
        // Predicated region
        $region21: #{tpu_custom_call.1} parent=11 // pred_check
          %p329 = pneg %p166
        $region22: #{tpu_custom_call.1} parent=11 // pred_check_branch
          %331 = sbr.rel (%p329) target = $region24
        $region23: #{tpu_custom_call.1} parent=11 // pred_region
          %333 = vsyncadd [#allocation6], 0
          %s335 = sshll.u32 %s5, 4
          %s336 = int_to_ptr.hbm [resolvable:$true] %s335
          %s337 = sshll.u32 [#allocation7], 4
          %s338 = int_to_ptr.vmem [resolvable:$true] %s337
          %340 = dma.hbm_to_vmem [thread:$0]  %s336, 64, %s338, [#allocation6]
        $region24: #{tpu_custom_call.1} parent=11 // pred_fallthru
          _
        // Predicated region
        $region25: #{tpu_custom_call.1} parent=11 // pred_check
          %p341 = pneg %p187
        $region26: #{tpu_custom_call.1} parent=11 // pred_check_branch
          %343 = sbr.rel (%p341) target = $region28
        $region27: #{tpu_custom_call.1} parent=11 // pred_region
          %345 = vsyncadd [#allocation9], 0
          %s347 = sshll.u32 %s6, 4
          %s348 = int_to_ptr.hbm [resolvable:$true] %s347
          %s349 = sshll.u32 [#allocation8], 4
          %s350 = int_to_ptr.vmem [resolvable:$true] %s349
          %352 = dma.hbm_to_vmem [thread:$0]  %s348, 16, %s350, [#allocation9]
        $region28: #{tpu_custom_call.1} parent=11 // pred_fallthru
          _
        // Predicated region
        $region29: #{tpu_custom_call.1} parent=11 // pred_check
          %p353 = pneg %p208
        $region30: #{tpu_custom_call.1} parent=11 // pred_check_branch
          %355 = sbr.rel (%p353) target = $region32
        $region31: #{tpu_custom_call.1} parent=11 // pred_region
          _
        $region32: #{tpu_custom_call.1} parent=11 // pred_fallthru
          _
        // Predicated region
        $region33: #{tpu_custom_call.1} parent=11 // pred_check
          %p356 = pneg %p229
        $region34: #{tpu_custom_call.1} parent=11 // pred_check_branch
          %358 = sbr.rel (%p356) target = $region36
        $region35: #{tpu_custom_call.1} parent=11 // pred_region
          _
        $region36: #{tpu_custom_call.1} parent=11 // pred_fallthru
          _
        // Predicated region
        $region37: #{tpu_custom_call.1} parent=11 // pred_check
          %p359 = pneg %p250
        $region38: #{tpu_custom_call.1} parent=11 // pred_check_branch
          %361 = sbr.rel (%p359) target = $region40
        $region39: #{tpu_custom_call.1} parent=11 // pred_region
          _
        $region40: #{tpu_custom_call.1} parent=11 // pred_fallthru
          _
        // Predicated region
        $region41: #{tpu_custom_call.1} parent=11 // pred_check
          %p362 = pneg %p271
        $region42: #{tpu_custom_call.1} parent=11 // pred_check_branch
          %364 = sbr.rel (%p362) target = $region44
        $region43: #{tpu_custom_call.1} parent=11 // pred_region
          _
        $region44: #{tpu_custom_call.1} parent=11 // pred_fallthru
          _
      $region12: #{tpu_custom_call.1} parent=5 // pred_fallthru
        _
      %p365 = scmp.lt.s32.totalorder %s25, 2
      // Predicated region
      $region45: #{tpu_custom_call.1} parent=5 // pred_check
        %p366 = pneg %p365
      $region46: #{tpu_custom_call.1} parent=5 // pred_check_branch
        %368 = sbr.rel (%p366) target = $region48
      $region47: #{tpu_custom_call.1} parent=5 // pred_region
        // Predicated region
        $region49: #{tpu_custom_call.1} parent=47 // pred_check
          %p369 = pneg %p45
        $region50: #{tpu_custom_call.1} parent=47 // pred_check_branch
          %371 = sbr.rel (%p369) target = $region52
        $region51: #{tpu_custom_call.1} parent=47 // pred_region
          %s372 = sand.u32 %s35, 1
          %s373 = scalar_lea.sflag [#allocation3], %s372
          %s374 = sand.u32 %s35, 1
          %s375 = smul.addr %s374, 8
          %s376 = scalar_lea.vmem [#allocation2], %s375
          %378 = vsyncadd %s373, 0
          %s379 = smul.addr %s25, 8
          %s380 = scalar_lea.hbm %s0, %s379
          %s382 = sshll.u32 %s380, 4
          %s383 = int_to_ptr.hbm [resolvable:$true] %s382
          %s384 = sshll.u32 %s376, 4
          %s385 = int_to_ptr.vmem [resolvable:$true] %s384
          %387 = dma.hbm_to_vmem [thread:$0]  %s383, 128, %s385, %s373
        $region52: #{tpu_custom_call.1} parent=47 // pred_fallthru
          _
        // Predicated region
        $region53: #{tpu_custom_call.1} parent=47 // pred_check
          %p388 = pneg %p71
        $region54: #{tpu_custom_call.1} parent=47 // pred_check_branch
          %390 = sbr.rel (%p388) target = $region56
        $region55: #{tpu_custom_call.1} parent=47 // pred_region
          %p391 = scmp.lt.s32.totalorder %s25, 1
          %s392 = scalar_select %p391, %s25, 1
          %s393 = smul.addr %s392, 4
          %s394 = scalar_lea.vmem %s1, %s393
        $region56: #{tpu_custom_call.1} parent=47 // pred_fallthru
          _
        // Predicated region
        $region57: #{tpu_custom_call.1} parent=47 // pred_check
          %p395 = pneg %p97
        $region58: #{tpu_custom_call.1} parent=47 // pred_check_branch
          %397 = sbr.rel (%p395) target = $region60
        $region59: #{tpu_custom_call.1} parent=47 // pred_region
          %p398 = scmp.lt.s32.totalorder %s25, 1
          %s399 = scalar_select %p398, %s25, 1
          %s400 = scalar_lea.vmem %s2, %s399
        $region60: #{tpu_custom_call.1} parent=47 // pred_fallthru
          _
      $region48: #{tpu_custom_call.1} parent=5 // pred_fallthru
        _
      %p401 = scmp.le.s32.totalorder 1, %s25
      %p402 = scmp.lt.s32.totalorder %s25, 3
      %p403 = pnand %p401, %p402
      %p404 = pneg %p403
      // Predicated region
      $region61: #{tpu_custom_call.1} parent=5 // pred_check
        _
      $region62: #{tpu_custom_call.1} parent=5 // pred_check_branch
        %406 = sbr.rel (%p403) target = $region64
      $region63: #{tpu_custom_call.1} parent=5 // pred_region
        %s407 = ssub.s32 %s25, 1
        %s408 = sand.u32 %s38, 1
        %s409 = scalar_lea.sflag [#allocation3], %s408
        %s410 = sand.u32 %s38, 1
        %s411 = smul.addr %s410, 8
        %s412 = scalar_lea.vmem [#allocation2], %s411
        // Predicated region
        $region65: #{tpu_custom_call.1} parent=63 // pred_check
          %p413 = pneg %p51
        $region66: #{tpu_custom_call.1} parent=63 // pred_check_branch
          %415 = sbr.rel (%p413) target = $region68
        $region67: #{tpu_custom_call.1} parent=63 // pred_region
          %417 = dma.done %s409, 128
        $region68: #{tpu_custom_call.1} parent=63 // pred_fallthru
          _
        // Predicated region
        $region69: #{tpu_custom_call.1} parent=63 // pred_check
          %p418 = pneg %p124
        $region70: #{tpu_custom_call.1} parent=63 // pred_check_branch
          %420 = sbr.rel (%p418) target = $region72
        $region71: #{tpu_custom_call.1} parent=63 // pred_region
          %422 = dma.done [#allocation6], 512
        $region72: #{tpu_custom_call.1} parent=63 // pred_fallthru
          _
        // Predicated region
        $region73: #{tpu_custom_call.1} parent=63 // pred_check
          %p423 = pneg %p166
        $region74: #{tpu_custom_call.1} parent=63 // pred_check_branch
          %425 = sbr.rel (%p423) target = $region76
        $region75: #{tpu_custom_call.1} parent=63 // pred_region
          %427 = dma.done [#allocation6], 64
        $region76: #{tpu_custom_call.1} parent=63 // pred_fallthru
          _
        // Predicated region
        $region77: #{tpu_custom_call.1} parent=63 // pred_check
          %p428 = pneg %p187
        $region78: #{tpu_custom_call.1} parent=63 // pred_check_branch
          %430 = sbr.rel (%p428) target = $region80
        $region79: #{tpu_custom_call.1} parent=63 // pred_region
          %432 = dma.done [#allocation9], 16
        $region80: #{tpu_custom_call.1} parent=63 // pred_fallthru
          _
        %s433 = sand.u32 %s38, 1
        %s434 = scalar_lea.sflag [#allocation3], %s433
        %s435 = sand.u32 %s38, 1
        %s436 = smul.addr %s435, 8
        %s437 = scalar_lea.vmem [#allocation2], %s436
        %p438 = pneg %p51
        %p439 = pneg %p48
        %p440 = scmp.lt.s32.totalorder %s30, 1
        %s441 = scalar_select %p440, %s30, 1
        %s442 = smul.addr %s441, 4
        %s443 = scalar_lea.vmem %s1, %s442
        %p444 = pneg %p77
        %p445 = pneg %p74
        %p446 = scmp.lt.s32.totalorder %s30, 1
        %s447 = scalar_select %p446, %s30, 1
        %s448 = scalar_lea.vmem %s2, %s447
        %p449 = pneg %p103
        %p450 = pneg %p100
        %p451 = pneg %p124
        %p452 = pneg %p121
        %p453 = pneg %p145
        %p454 = pneg %p142
        %p455 = pneg %p166
        %p456 = pneg %p163
        %p457 = pneg %p187
        %p458 = pneg %p184
        %p459 = pneg %p208
        %p460 = pneg %p205
        %p461 = pneg %p229
        %p462 = pneg %p226
        %p463 = pneg %p250
        %p464 = pneg %p247
        %p465 = pneg %p271
        %p466 = pneg %p268
        %p467 = pneg %p297
        %p468 = pneg %p294
        %s469 = sand.u32 %s284, 1
        %s470 = scalar_lea.sflag [#allocation4], %s469
        %s471 = sand.u32 %s284, 1
        %s472 = scalar_lea.vmem [#allocation10], %s471
        %p473 = scmp.lt.s32.totalorder %s30, 1
        %s474 = scalar_select %p473, %s30, 1
        %s475 = smul.addr %s474, 4
        %s476 = scalar_lea.vmem %s1, %s475
        %p477 = scmp.lt.s32.totalorder %s30, 1
        %s478 = scalar_select %p477, %s30, 1
        %s479 = scalar_lea.vmem %s2, %s478
        %v480 = vld [vmem:[%s412] sm:$0xff]
        %v481 = vld [vmem:[%s476] sm:$0xf]
        %v482 = vunpack.c.l.bf16 %v481
        %v483 = vld [vmem:[%s479] sm:$0x1]
        %v484 = vld [vmem:[#allocation5] sm:$0xff]
        %v485 = vld [vmem:[#allocation5 + $0x8] sm:$0xff]
        %v486 = vld [vmem:[#allocation5 + $0x10] sm:$0xff]
        %v487 = vld [vmem:[#allocation5 + $0x18] sm:$0xff]
        %vm488 = vcmask 261120
        %v490 = vsel %vm488, %v480, 0
        %492 = vmatpush.msra.mxu0 0.0
        %493 = vmatpush.msra.mxu0 0.0
        %494 = vmatpush.msra.mxu0 0.0
        %495 = vmatpush.msra.mxu0 0.0
        %496 = vmatpush.msra.mxu0 0.0
        %497 = vmatpush.msra.mxu0 0.0
        %498 = vmatpush.msra.mxu0 0.0
        %499 = vmatpush.msra.mxu0 0.0
        %500 = vmatpush.msra.mxu0 0.0
        %501 = vmatpush.msra.mxu0 0.0
        %502 = vmatpush.msra.mxu0 0.0
        %503 = vmatpush.msra.mxu0 0.0
        %504 = vmatpush.msra.mxu0 %v487
        %505 = vmatpush.msra.mxu0 %v486
        %506 = vmatpush.msra.mxu0 %v485
        %507 = vmatpush.msra.mxu0 %v484
        %508 = vmatmul.f32.gmra.mxu0 %v490
        %v509 = vpop.f32.mrf.mxu0
        %v510 = vadd.f32 0.0, %v509
        %511 = vdwg.mxu0
        %v512 = vld [vmem:[%s4] sm:$0xff]
        %v513 = vld [vmem:[%s4 + $0x8] sm:$0xff]
        %v514 = vld [vmem:[%s4 + $0x10] sm:$0xff]
        %v515 = vld [vmem:[%s4 + $0x18] sm:$0xff]
        %v516 = vld [vmem:[%s4 + $0x20] sm:$0xff]
        %v517 = vld [vmem:[%s4 + $0x28] sm:$0xff]
        %v518 = vld [vmem:[%s4 + $0x30] sm:$0xff]
        %v519 = vld [vmem:[%s4 + $0x38] sm:$0xff]
        %vm520 = vcmask 523264
        %v522 = vsel %vm520, %v510, 0
        %524 = vmatpush.msra.mxu0 0.0
        %525 = vmatpush.msra.mxu0 0.0
        %526 = vmatpush.msra.mxu0 0.0
        %527 = vmatpush.msra.mxu0 0.0
        %528 = vmatpush.msra.mxu0 0.0
        %529 = vmatpush.msra.mxu0 0.0
        %530 = vmatpush.msra.mxu0 0.0
        %531 = vmatpush.msra.mxu0 0.0
        %532 = vmatpush.msra.mxu0 %v519
        %533 = vmatpush.msra.mxu0 %v518
        %534 = vmatpush.msra.mxu0 %v517
        %535 = vmatpush.msra.mxu0 %v516
        %536 = vmatpush.msra.mxu0 %v515
        %537 = vmatpush.msra.mxu0 %v514
        %538 = vmatpush.msra.mxu0 %v513
        %539 = vmatpush.msra.mxu0 %v512
        %540 = vmatmul.f32.gmra.mxu0 %v522
        %v541 = vpop.f32.mrf.mxu0
        %v542 = vadd.f32 0.0, %v541
        %543 = vdwg.mxu0
        %v544 = vld [vmem:[#allocation7] sm:$0xf]
        %v546 = vsel %vm520, %v544, 0
        %548 = vmatpush.xpose.msra.mxu0 0.0
        %549 = vmatpush.xpose.msra.mxu0 0.0
        %550 = vmatpush.xpose.msra.mxu0 0.0
        %551 = vmatpush.xpose.msra.mxu0 0.0
        %552 = vmatpush.xpose.msra.mxu0 0.0
        %553 = vmatpush.xpose.msra.mxu0 0.0
        %554 = vmatpush.xpose.msra.mxu0 0.0
        %555 = vmatpush.xpose.msra.mxu0 0.0
        %556 = vmatpush.xpose.msra.mxu0 0.0
        %557 = vmatpush.xpose.msra.mxu0 0.0
        %558 = vmatpush.xpose.msra.mxu0 0.0
        %559 = vmatpush.xpose.msra.mxu0 0.0
        %560 = vmatpush.xpose.msra.mxu0 0.0
        %561 = vmatpush.xpose.msra.mxu0 0.0
        %562 = vmatpush.xpose.msra.mxu0 0.0
        %563 = vmatpush.xpose.msra.mxu0 %v522
        %564 = vmatmul.f32.gmra.mxu0 %v546
        %v565 = vpop.f32.mrf.mxu0
        %v566 = vadd.f32 0.0, %v565
        %567 = vdwg.mxu0
        %569 = vset.pattern.permute.xlu0 0
        %570 = vperm.xlu0 %569, %v542
        %v571 = vpop.permute.xlu0 %570
        %v573 = vperm.slane %v566, 0
        %v574 = vadd.f32 %v571, %v573
        %vm575 = vcmp.gt.f32.partialorder %v574, 0.0
        %v576 = vmul.f32 %v574, 0.2
        %v577 = vsel %vm575, %v574, %v576
        %v578 = vadd.f32 %v577, %v482
        %vm579 = vcmask 64512
        %v580 = vsel %vm579, %v578, -inf
        %581 = vmax.xlane.f32.xlu0 %v580
        %v582 = vpop.xlane.xlu0 %581
        %v583 = vsub.f32 %v578, %v582
        %v584 = vmul.f32 %v583, 1.442695
        %v585 = vpow.pop %v584
        %v586 = vsel %vm579, %v585, 0.0
        %587 = vadd.xlane.f32.xlu0 %v586
        %v588 = vpop.xlane.xlu0 %587
        %v589 = vrcp.pop %v588
        %v590 = vmul.f32 %v588, %v589
        %v591 = vsub.f32 2.0, %v590
        %v592 = vmul.f32 %v589, %v591
        %v594 = vsel %vm579, %v585, 0
        %596 = vmatpush.msra.mxu0 0.0
        %597 = vmatpush.msra.mxu0 0.0
        %598 = vmatpush.msra.mxu0 0.0
        %599 = vmatpush.msra.mxu0 0.0
        %600 = vmatpush.msra.mxu0 0.0
        %601 = vmatpush.msra.mxu0 0.0
        %602 = vmatpush.msra.mxu0 0.0
        %603 = vmatpush.msra.mxu0 0.0
        %604 = vmatpush.msra.mxu0 0.0
        %605 = vmatpush.msra.mxu0 0.0
        %606 = vmatpush.msra.mxu0 0.0
        %607 = vmatpush.msra.mxu0 0.0
        %608 = vmatpush.msra.mxu0 0.0
        %609 = vmatpush.msra.mxu0 0.0
        %610 = vmatpush.msra.mxu0 0.0
        %611 = vmatpush.msra.mxu0 %v510
        %612 = vmatmul.f32.gmra.mxu0 %v594
        %v613 = vpop.f32.mrf.mxu0
        %v614 = vadd.f32 0.0, %v613
        %615 = vdwg.mxu0
        %v616 = vmul.f32 %v614, %v592
        %617 = vset.pattern.permute.xlu0 1
        %618 = vperm.xlu0 %617, %v542
        %v619 = vpop.permute.xlu0 %618
        %v621 = vperm.slane %v566, 1
        %v622 = vadd.f32 %v619, %v621
        %vm623 = vcmp.gt.f32.partialorder %v622, 0.0
        %v624 = vmul.f32 %v622, 0.2
        %v625 = vsel %vm623, %v622, %v624
        %v626 = vadd.f32 %v625, %v482
        %v627 = vsel %vm579, %v626, -inf
        %628 = vmax.xlane.f32.xlu0 %v627
        %v629 = vpop.xlane.xlu0 %628
        %v630 = vsub.f32 %v626, %v629
        %v631 = vmul.f32 %v630, 1.442695
        %v632 = vpow.pop %v631
        %v633 = vsel %vm579, %v632, 0.0
        %634 = vadd.xlane.f32.xlu0 %v633
        %v635 = vpop.xlane.xlu0 %634
        %v636 = vrcp.pop %v635
        %v637 = vmul.f32 %v635, %v636
        %v638 = vsub.f32 2.0, %v637
        %v639 = vmul.f32 %v636, %v638
        %640 = vrot.lane.b32.xlu0 %v510, 112
        %v641 = vpop.permute.xlu0 %640
        %v644 = vsel %vm579, %v632, 0
        %646 = vmatpush.msra.mxu0 0.0
        %647 = vmatpush.msra.mxu0 0.0
        %648 = vmatpush.msra.mxu0 0.0
        %649 = vmatpush.msra.mxu0 0.0
        %650 = vmatpush.msra.mxu0 0.0
        %651 = vmatpush.msra.mxu0 0.0
        %652 = vmatpush.msra.mxu0 0.0
        %653 = vmatpush.msra.mxu0 0.0
        %654 = vmatpush.msra.mxu0 0.0
        %655 = vmatpush.msra.mxu0 0.0
        %656 = vmatpush.msra.mxu0 0.0
        %657 = vmatpush.msra.mxu0 0.0
        %658 = vmatpush.msra.mxu0 0.0
        %659 = vmatpush.msra.mxu0 0.0
        %660 = vmatpush.msra.mxu0 0.0
        %661 = vmatpush.msra.mxu0 %v641
        %662 = vmatmul.f32.gmra.mxu0 %v644
        %v663 = vpop.f32.mrf.mxu0
        %v664 = vadd.f32 0.0, %v663
        %665 = vdwg.mxu0
        %v666 = vmul.f32 %v664, %v639
        %667 = vset.pattern.permute.xlu0 2
        %668 = vperm.xlu0 %667, %v542
        %v669 = vpop.permute.xlu0 %668
        %v671 = vperm.slane %v566, 2
        %v672 = vadd.f32 %v669, %v671
        %vm673 = vcmp.gt.f32.partialorder %v672, 0.0
        %v674 = vmul.f32 %v672, 0.2
        %v675 = vsel %vm673, %v672, %v674
        %v676 = vadd.f32 %v675, %v482
        %v677 = vsel %vm579, %v676, -inf
        %678 = vmax.xlane.f32.xlu0 %v677
        %v679 = vpop.xlane.xlu0 %678
        %v680 = vsub.f32 %v676, %v679
        %v681 = vmul.f32 %v680, 1.442695
        %v682 = vpow.pop %v681
        %v683 = vsel %vm579, %v682, 0.0
        %684 = vadd.xlane.f32.xlu0 %v683
        %v685 = vpop.xlane.xlu0 %684
        %v686 = vrcp.pop %v685
        %v687 = vmul.f32 %v685, %v686
        %v688 = vsub.f32 2.0, %v687
        %v689 = vmul.f32 %v686, %v688
        %690 = vrot.lane.b32.xlu0 %v510, 96
        %v691 = vpop.permute.xlu0 %690
        %v694 = vsel %vm579, %v682, 0
        %696 = vmatpush.msra.mxu0 0.0
        %697 = vmatpush.msra.mxu0 0.0
        %698 = vmatpush.msra.mxu0 0.0
        %699 = vmatpush.msra.mxu0 0.0
        %700 = vmatpush.msra.mxu0 0.0
        %701 = vmatpush.msra.mxu0 0.0
        %702 = vmatpush.msra.mxu0 0.0
        %703 = vmatpush.msra.mxu0 0.0
        %704 = vmatpush.msra.mxu0 0.0
        %705 = vmatpush.msra.mxu0 0.0
        %706 = vmatpush.msra.mxu0 0.0
        %707 = vmatpush.msra.mxu0 0.0
        %708 = vmatpush.msra.mxu0 0.0
        %709 = vmatpush.msra.mxu0 0.0
        %710 = vmatpush.msra.mxu0 0.0
        %711 = vmatpush.msra.mxu0 %v691
        %712 = vmatmul.f32.gmra.mxu0 %v694
        %v713 = vpop.f32.mrf.mxu0
        %v714 = vadd.f32 0.0, %v713
        %715 = vdwg.mxu0
        %v716 = vmul.f32 %v714, %v689
        %717 = vset.pattern.permute.xlu0 3
        %718 = vperm.xlu0 %717, %v542
        %v719 = vpop.permute.xlu0 %718
        %v721 = vperm.slane %v566, 3
        %v722 = vadd.f32 %v719, %v721
        %vm723 = vcmp.gt.f32.partialorder %v722, 0.0
        %v724 = vmul.f32 %v722, 0.2
        %v725 = vsel %vm723, %v722, %v724
        %v726 = vadd.f32 %v725, %v482
        %v727 = vsel %vm579, %v726, -inf
        %728 = vmax.xlane.f32.xlu0 %v727
        %v729 = vpop.xlane.xlu0 %728
        %v730 = vsub.f32 %v726, %v729
        %v731 = vmul.f32 %v730, 1.442695
        %v732 = vpow.pop %v731
        %v733 = vsel %vm579, %v732, 0.0
        %734 = vadd.xlane.f32.xlu0 %v733
        %v735 = vpop.xlane.xlu0 %734
        %v736 = vrcp.pop %v735
        %v737 = vmul.f32 %v735, %v736
        %v738 = vsub.f32 2.0, %v737
        %v739 = vmul.f32 %v736, %v738
        %740 = vrot.lane.b32.xlu0 %v510, 80
        %v741 = vpop.permute.xlu0 %740
        %v744 = vsel %vm579, %v732, 0
        %746 = vmatpush.msra.mxu0 0.0
        %747 = vmatpush.msra.mxu0 0.0
        %748 = vmatpush.msra.mxu0 0.0
        %749 = vmatpush.msra.mxu0 0.0
        %750 = vmatpush.msra.mxu0 0.0
        %751 = vmatpush.msra.mxu0 0.0
        %752 = vmatpush.msra.mxu0 0.0
        %753 = vmatpush.msra.mxu0 0.0
        %754 = vmatpush.msra.mxu0 0.0
        %755 = vmatpush.msra.mxu0 0.0
        %756 = vmatpush.msra.mxu0 0.0
        %757 = vmatpush.msra.mxu0 0.0
        %758 = vmatpush.msra.mxu0 0.0
        %759 = vmatpush.msra.mxu0 0.0
        %760 = vmatpush.msra.mxu0 0.0
        %761 = vmatpush.msra.mxu0 %v741
        %762 = vmatmul.f32.gmra.mxu0 %v744
        %v763 = vpop.f32.mrf.mxu0
        %v764 = vadd.f32 0.0, %v763
        %765 = vdwg.mxu0
        %v766 = vmul.f32 %v764, %v739
        %768 = vrot.lane.b32.xlu0 %v666, 16
        %v769 = vpop.permute.xlu0 %768
        %772 = vrot.lane.b32.xlu0 %v716, 32
        %v773 = vpop.permute.xlu0 %772
        %776 = vrot.lane.b32.xlu0 %v766, 48
        %v777 = vpop.permute.xlu0 %776
        %vm779 = vcmask 130048
        %v780 = vsel %vm779, %v616, %v769
        %v781 = vsel %vm488, %v780, %v773
        %vm782 = vcmask 392192
        %v783 = vsel %vm782, %v781, %v777
        %v784 = vld [vmem:[#allocation8] sm:$0x1]
        %v786 = vperm.slane %v784, 0
        %v788 = vadd.f32 %v783, %v786
        %v789 = vmax.f32 %v788, 0.0
        %v790 = vld [vmem:[%s7] sm:$0xff]
        %v791 = vld [vmem:[%s7 + $0x8] sm:$0xff]
        %v792 = vld [vmem:[%s7 + $0x10] sm:$0xff]
        %v793 = vld [vmem:[%s7 + $0x18] sm:$0xff]
        %v794 = vld [vmem:[%s7 + $0x20] sm:$0xff]
        %v795 = vld [vmem:[%s7 + $0x28] sm:$0xff]
        %v796 = vld [vmem:[%s7 + $0x30] sm:$0xff]
        %v797 = vld [vmem:[%s7 + $0x38] sm:$0xff]
        %v799 = vsel %vm520, %v789, 0
        %801 = vmatpush.msra.mxu0 0.0
        %802 = vmatpush.msra.mxu0 0.0
        %803 = vmatpush.msra.mxu0 0.0
        %804 = vmatpush.msra.mxu0 0.0
        %805 = vmatpush.msra.mxu0 0.0
        %806 = vmatpush.msra.mxu0 0.0
        %807 = vmatpush.msra.mxu0 0.0
        %808 = vmatpush.msra.mxu0 0.0
        %809 = vmatpush.msra.mxu0 %v797
        %810 = vmatpush.msra.mxu0 %v796
        %811 = vmatpush.msra.mxu0 %v795
        %812 = vmatpush.msra.mxu0 %v794
        %813 = vmatpush.msra.mxu0 %v793
        %814 = vmatpush.msra.mxu0 %v792
        %815 = vmatpush.msra.mxu0 %v791
        %816 = vmatpush.msra.mxu0 %v790
        %817 = vmatmul.f32.gmra.mxu0 %v799
        %v818 = vpop.f32.mrf.mxu0
        %v819 = vadd.f32 0.0, %v818
        %820 = vdwg.mxu0
        %v821 = vld [vmem:[%s8] sm:$0x1]
        %v823 = vperm.slane %v821, 0
        %v825 = vmul.f32 %v819, %v823
        %826 = vadd.xlane.f32.xlu0 %v825
        %v827 = vpop.xlane.xlu0 %826
        %v828 = vld [vmem:[%s9] sm:$0x1]
        %829 = vmatpush.xpose.msra.mxu0 0.0
        %830 = vmatpush.xpose.msra.mxu0 0.0
        %831 = vmatpush.xpose.msra.mxu0 0.0
        %832 = vmatpush.xpose.msra.mxu0 0.0
        %833 = vmatpush.xpose.msra.mxu0 0.0
        %834 = vmatpush.xpose.msra.mxu0 0.0
        %835 = vmatpush.xpose.msra.mxu0 0.0
        %836 = vmatpush.xpose.msra.mxu0 0.0
        %837 = vmatpush.xpose.msra.mxu0 0.0
        %838 = vmatpush.xpose.msra.mxu0 0.0
        %839 = vmatpush.xpose.msra.mxu0 0.0
        %840 = vmatpush.xpose.msra.mxu0 0.0
        %841 = vmatpush.xpose.msra.mxu0 0.0
        %842 = vmatpush.xpose.msra.mxu0 0.0
        %843 = vmatpush.xpose.msra.mxu0 0.0
        %844 = vmatpush.xpose.msra.mxu0 %v819
        %845 = vmatmul.f32.gmra.mxu0 %v828
        %v846 = vpop.f32.mrf.mxu0
        %v847 = vadd.f32 0.0, %v846
        %848 = vdwg.mxu0
        %v849 = vperm.slane %v847, 0
        %v850 = vadd.f32 %v827, %v849
        %vm851 = vcmp.gt.f32.partialorder %v850, 0.0
        %v852 = vmul.f32 %v850, 0.2
        %v853 = vsel %vm851, %v850, %v852
        %v854 = vadd.f32 %v853, %v482
        %v855 = vsel %vm579, %v854, -inf
        %856 = vmax.xlane.f32.xlu0 %v855
        %v857 = vpop.xlane.xlu0 %856
        %v858 = vsub.f32 %v854, %v857
        %v859 = vmul.f32 %v858, 1.442695
        %v860 = vpow.pop %v859
        %v861 = vsel %vm579, %v860, 0.0
        %862 = vadd.xlane.f32.xlu0 %v861
        %v863 = vpop.xlane.xlu0 %862
        %v864 = vrcp.pop %v863
        %v865 = vmul.f32 %v863, %v864
        %v866 = vsub.f32 2.0, %v865
        %v867 = vmul.f32 %v864, %v866
        %v869 = vsel %vm579, %v860, 0
        %871 = vmatpush.msra.mxu0 0.0
        %872 = vmatpush.msra.mxu0 0.0
        %873 = vmatpush.msra.mxu0 0.0
        %874 = vmatpush.msra.mxu0 0.0
        %875 = vmatpush.msra.mxu0 0.0
        %876 = vmatpush.msra.mxu0 0.0
        %877 = vmatpush.msra.mxu0 0.0
        %878 = vmatpush.msra.mxu0 0.0
        %879 = vmatpush.msra.mxu0 0.0
        %880 = vmatpush.msra.mxu0 0.0
        %881 = vmatpush.msra.mxu0 0.0
        %882 = vmatpush.msra.mxu0 0.0
        %883 = vmatpush.msra.mxu0 0.0
        %884 = vmatpush.msra.mxu0 0.0
        %885 = vmatpush.msra.mxu0 0.0
        %886 = vmatpush.msra.mxu0 %v819
        %887 = vmatmul.f32.gmra.mxu0 %v869
        %v888 = vpop.f32.mrf.mxu0
        %v889 = vadd.f32 0.0, %v888
        %890 = vdwg.mxu0
        %v891 = vmul.f32 %v889, %v867
        %v892 = vld [vmem:[%s10] sm:$0x1]
        %v894 = vperm.slane %v892, 0
        %v896 = vadd.f32 %v891, %v894
        %v898 = vsel %vm579, %v483, 0
        %900 = vmatpush.msra.mxu0 0.0
        %901 = vmatpush.msra.mxu0 0.0
        %902 = vmatpush.msra.mxu0 0.0
        %903 = vmatpush.msra.mxu0 0.0
        %904 = vmatpush.msra.mxu0 0.0
        %905 = vmatpush.msra.mxu0 0.0
        %906 = vmatpush.msra.mxu0 0.0
        %907 = vmatpush.msra.mxu0 0.0
        %908 = vmatpush.msra.mxu0 0.0
        %909 = vmatpush.msra.mxu0 0.0
        %910 = vmatpush.msra.mxu0 0.0
        %911 = vmatpush.msra.mxu0 0.0
        %912 = vmatpush.msra.mxu0 0.0
        %913 = vmatpush.msra.mxu0 0.0
        %914 = vmatpush.msra.mxu0 0.0
        %915 = vmatpush.msra.mxu0 %v896
        %916 = vmatmul.f32.gmra.mxu0 %v898
        %v917 = vpop.f32.mrf.mxu0
        %v918 = vadd.f32 0.0, %v917
        %919 = vdwg.mxu0
        %920 = vst [vmem:[%s472] sm:$0x1] %v918
        %s921 = sand.u32 %s284, 1
        %s922 = scalar_lea.sflag [#allocation4], %s921
        %s923 = sand.u32 %s284, 1
        %s924 = scalar_lea.vmem [#allocation10], %s923
        // Predicated region
        $region81: #{tpu_custom_call.1} parent=63 // pred_check
          %p925 = pneg %p294
        $region82: #{tpu_custom_call.1} parent=63 // pred_check_branch
          %927 = sbr.rel (%p925) target = $region84
        $region83: #{tpu_custom_call.1} parent=63 // pred_region
          %929 = vsyncadd %s922, 0
          %s930 = scalar_lea.hbm %s11, %s30
          %s932 = sshll.u32 %s924, 4
          %s933 = int_to_ptr.vmem [resolvable:$true] %s932
          %s934 = sshll.u32 %s930, 4
          %s935 = int_to_ptr.hbm [resolvable:$true] %s934
          %937 = dma.vmem_to_hbm [thread:$0]  %s933, 16, %s935, %s922
        $region84: #{tpu_custom_call.1} parent=63 // pred_fallthru
          _
      $region64: #{tpu_custom_call.1} parent=5 // pred_fallthru
        _
      %p938 = scmp.le.s32.totalorder 2, %s25
      // Predicated region
      $region85: #{tpu_custom_call.1} parent=5 // pred_check
        %p939 = pneg %p938
      $region86: #{tpu_custom_call.1} parent=5 // pred_check_branch
        %941 = sbr.rel (%p939) target = $region88
      $region87: #{tpu_custom_call.1} parent=5 // pred_region
        %s942 = ssub.s32 %s25, 2
        // Predicated region
        $region89: #{tpu_custom_call.1} parent=87 // pred_check
          %p943 = pneg %p300
        $region90: #{tpu_custom_call.1} parent=87 // pred_check_branch
          %945 = sbr.rel (%p943) target = $region92
        $region91: #{tpu_custom_call.1} parent=87 // pred_region
          %s946 = sand.u32 %s285, 1
          %s947 = scalar_lea.sflag [#allocation4], %s946
          %s948 = sand.u32 %s285, 1
          %s949 = scalar_lea.vmem [#allocation10], %s948
          %951 = dma.done %s947, 16
        $region92: #{tpu_custom_call.1} parent=87 // pred_fallthru
          _
      $region88: #{tpu_custom_call.1} parent=5 // pred_fallthru
        _
    $region6: #{tpu_custom_call.1} parent=1 // loop_footer
      %s29 = sadd.s32 1, %s25
    $region7: #{tpu_custom_call.1} parent=1 // loop_footer_branch
      %24 = sbr.rel target = $region3
    $region8: #{tpu_custom_call.1} parent=1 // loop_exit
      _
    %952 = vsyncpa [#allocation3], 1
    %s953 = scalar_lea.sflag [#allocation3], 1
    %954 = vsyncpa %s953, 1
    %955 = vsyncpa [#allocation6], 1
    %956 = vsyncpa [#allocation9], 1
    %957 = vsyncpa [#allocation4], 1
    %s958 = scalar_lea.sflag [#allocation4], 1
    %959 = vsyncpa %s958, 1

</llo_original>
